<compile_context>
chip_gen: v7x
topology: tpu7x:2x2x1
jax: 0.10.0
libtpu: 0.0.40
codegen_flags: <defaults>
</compile_context>

<pallas_src>
import jax
import jax.numpy as jnp
from jax import lax
from jax.experimental import pallas as pl
from jax.experimental.pallas import tpu as pltpu


def _round_up(x, m):
    return ((x + m - 1) // m) * m


def _pad_axis(x, multiple, axis):
    pad = (-x.shape[axis]) % multiple
    if pad == 0:
        return x
    widths = [(0, 0)] * x.ndim
    widths[axis] = (0, pad)
    return jnp.pad(x, widths)


# ---------------------------------------------------------------------------
# Generic tiled matmul + bias:  out = x @ w + b   (f32 accumulation on the MXU)
# Used for the hoisted input projection and the hoisted output head.
# ---------------------------------------------------------------------------
def _matmul_bias_kernel(x_ref, w_ref, b_ref, o_ref, acc_ref):
    @pl.when(pl.program_id(2) == 0)
    def _():
        acc_ref[...] = jnp.zeros_like(acc_ref)

    acc_ref[...] += jnp.dot(x_ref[...], w_ref[...],
                            preferred_element_type=jnp.float32)

    @pl.when(pl.program_id(2) == pl.num_programs(2) - 1)
    def _():
        o_ref[...] = (acc_ref[...] + b_ref[...]).astype(o_ref.dtype)


def _matmul_bias(x, w, b, *, out_dtype=jnp.float32, tm=128, tn=128, tk=128):
    M, K = x.shape
    _, N = w.shape
    tm = min(tm, _round_up(M, 8))
    tn = min(tn, _round_up(N, 128))
    tk = min(tk, _round_up(K, 128))

    xp = _pad_axis(_pad_axis(x, tm, 0), tk, 1)
    wp = _pad_axis(_pad_axis(w, tk, 0), tn, 1)
    bp = _pad_axis(b.reshape(1, N).astype(jnp.float32), tn, 1)
    Mp, Kp = xp.shape
    Np = wp.shape[1]

    out = pl.pallas_call(
        _matmul_bias_kernel,
        out_shape=jax.ShapeDtypeStruct((Mp, Np), out_dtype),
        grid_spec=pltpu.PrefetchScalarGridSpec(
            num_scalar_prefetch=0,
            grid=(Mp // tm, Np // tn, Kp // tk),
            in_specs=[
                pl.BlockSpec((tm, tk), lambda i, j, k: (i, k)),
                pl.BlockSpec((tk, tn), lambda i, j, k: (k, j)),
                pl.BlockSpec((1, tn), lambda i, j, k: (0, j)),
            ],
            out_specs=pl.BlockSpec((tm, tn), lambda i, j, k: (i, j)),
            scratch_shapes=[pltpu.VMEM((tm, tn), jnp.float32)],
        ),
        compiler_params=pltpu.CompilerParams(
            dimension_semantics=("parallel", "parallel", "arbitrary")),
    )(xp, wp, bp)
    return out[:M, :N]


# ---------------------------------------------------------------------------
# LSTM recurrence over a chunk of timesteps.  Only h @ W_hh^T is inside the loop;
# input projection and output head are done outside as large matmuls.
# ---------------------------------------------------------------------------
def _lstm_recurrence_kernel(gx_ref, whh_ref, h_out_ref, h_sc, c_sc):
    # gx_ref   : (T_CHUNK, B_BLK, 4H) f32   pre-activations x @ W_ih^T + (b_ih + b_hh)
    # whh_ref  : (H, 4H)                    recurrent weight (compute dtype)
    # h_out_ref: (T_CHUNK, B_BLK, H)        hidden states for this chunk / batch block
    # h_sc/c_sc: (B_BLK, H) f32             carried state (per batch block)
    @pl.when(pl.program_id(1) == 0)          # first time-chunk of this batch block
    def _():
        h_sc[...] = jnp.zeros_like(h_sc)
        c_sc[...] = jnp.zeros_like(c_sc)

    H = h_sc.shape[-1]
    t_chunk = gx_ref.shape[0]

    def step(t, carry):
        gates = gx_ref[t] + jnp.dot(h_sc[...].astype(whh_ref.dtype),
                                    whh_ref[...],
                                    preferred_element_type=jnp.float32)
        # PyTorch nn.LSTM gate order [i, f, g, o]; H % 128 == 0 so these slices are
        # lane-aligned (no cross-lane selects inside the sequential loop).
        i_g = jax.nn.sigmoid(gates[:, 0 * H:1 * H])
        f_g = jax.nn.sigmoid(gates[:, 1 * H:2 * H])
        g_g = jnp.tanh(gates[:, 2 * H:3 * H])
        o_g = jax.nn.sigmoid(gates[:, 3 * H:4 * H])
        c_new = f_g * c_sc[...] + i_g * g_g
        h_new = o_g * jnp.tanh(c_new)
        c_sc[...] = c_new
        h_sc[...] = h_new
        h_out_ref[t] = h_new.astype(h_out_ref.dtype)
        return carry

    unroll = True if t_chunk <= 16 else 8
    lax.fori_loop(0, t_chunk, step, 0, unroll=unroll)


# ---------------------------------------------------------------------------
# Full forward: embedding -> LSTM -> linear head
# ---------------------------------------------------------------------------
def lstm_lm_forward(tokens, emb_table, w_ih, w_hh, b_ih, b_hh, w_out, b_out,
                    *, compute_dtype=jnp.bfloat16, t_chunk=64, b_block=8):
    """tokens: (B, T) int32. Returns logits (B, T, V) float32."""
    B, T = tokens.shape
    V, E = emb_table.shape
    H = w_hh.shape[1]
    assert H % 128 == 0, "dim_hid must be a multiple of 128 for lane-aligned gate slices"

    cdt = compute_dtype

    # --- 1. embedding lookup (glue) ------------------------------------------
    # TODO(synk): data-dependent embedding row gather left to XLA (jnp.take).
    x_emb = jnp.take(emb_table, tokens, axis=0)                   # (B, T, E) f32

    # --- padding to TPU-friendly shapes --------------------------------------
    b_block = min(b_block, _round_up(B, 8))
    t_chunk = min(t_chunk, T)
    x_emb = _pad_axis(x_emb, b_block, 0)                          # pad batch to multiple of 8
    x_emb = _pad_axis(x_emb, t_chunk, 1)                          # pad time to chunk multiple
    B_pad, T_pad = x_emb.shape[0], x_emb.shape[1]
    x_tm = jnp.transpose(x_emb, (1, 0, 2))                        # (T_pad, B_pad, E)

    # --- 2. input projection hoisted out of the recurrence -------------------
    wih_t = w_ih.T.astype(cdt)                                    # (E, 4H)
    bias = (b_ih + b_hh).astype(jnp.float32)                      # (4H,)
    gates_x = _matmul_bias(x_tm.reshape(T_pad * B_pad, E).astype(cdt),
                           wih_t, bias, out_dtype=jnp.float32)
    gates_x = gates_x.reshape(T_pad, B_pad, 4 * H)                # (T_pad, B_pad, 4H) f32

    # --- 3. sequential LSTM recurrence ---------------------------------------
    whh_t = w_hh.T.astype(cdt)                                    # (H, 4H)
    num_b_blocks = B_pad // b_block
    num_t_chunks = T_pad // t_chunk

    h_all = pl.pallas_call(
        _lstm_recurrence_kernel,
        out_shape=jax.ShapeDtypeStruct((T_pad, B_pad, H), cdt),
        grid_spec=pltpu.PrefetchScalarGridSpec(
            num_scalar_prefetch=0,
            grid=(num_b_blocks, num_t_chunks),
            in_specs=[
                pl.BlockSpec((t_chunk, b_block, 4 * H), lambda b, t: (t, b, 0)),
                pl.BlockSpec((H, 4 * H), lambda b, t: (0, 0)),
            ],
            out_specs=pl.BlockSpec((t_chunk, b_block, H), lambda b, t: (t, b, 0)),
            scratch_shapes=[
                pltpu.VMEM((b_block, H), jnp.float32),            # h carry
                pltpu.VMEM((b_block, H), jnp.float32),            # c carry
            ],
        ),
        compiler_params=pltpu.CompilerParams(
            # batch axis is parallel (usable by the 2 TensorCores on v7x);
            # time-chunk axis is the sequential recurrence.
            dimension_semantics=("parallel", "arbitrary")),
    )(gates_x, whh_t)

    # --- 4. output head hoisted out of the recurrence ------------------------
    wout_t = _pad_axis(w_out.T.astype(cdt), 128, 1)               # (H, V_pad), lane-dense
    bout = _pad_axis(b_out.astype(jnp.float32), 128, 0)           # (V_pad,)
    V_pad = wout_t.shape[1]
    logits = _matmul_bias(h_all.reshape(T_pad * B_pad, H), wout_t, bout,
                          out_dtype=jnp.float32)
    logits = logits.reshape(T_pad, B_pad, V_pad)
    logits = jnp.transpose(logits, (1, 0, 2))                     # (B_pad, T_pad, V_pad)
    return logits[:B, :T, :V]


# ---------------------------------------------------------------------------
# Pure-JAX reference (mirrors torch nn.Embedding -> nn.LSTM -> nn.Linear), f32.
# ---------------------------------------------------------------------------
def _reference_forward(tokens, emb_table, w_ih, w_hh, b_ih, b_hh, w_out, b_out):
    x = jnp.take(emb_table, tokens, axis=0)                       # (B, T, E)
    B, T, E = x.shape
    H = w_hh.shape[1]

    def step(carry, x_t):
        h, c = carry
        gates = x_t @ w_ih.T + b_ih + h @ w_hh.T + b_hh
        i = jax.nn.sigmoid(gates[:, 0 * H:1 * H])
        f = jax.nn.sigmoid(gates[:, 1 * H:2 * H])
        g = jnp.tanh(gates[:, 2 * H:3 * H])
        o = jax.nn.sigmoid(gates[:, 3 * H:4 * H])
        c = f * c + i * g
        h = o * jnp.tanh(c)
        return (h, c), h

    h0 = jnp.zeros((B, H), jnp.float32)
    c0 = jnp.zeros((B, H), jnp.float32)
    _, hs = lax.scan(step, (h0, c0), jnp.transpose(x, (1, 0, 2)))
    hs = jnp.transpose(hs, (1, 0, 2))                             # (B, T, H)
    return hs @ w_out.T + b_out


if __name__ == "__main__":
    # Module defaults: vocab=190, dim_emb=128, dim_hid=256; small batch/sequence for debug.
    B, T = 2, 8
    V, E, H = 190, 128, 256

    key = jax.random.PRNGKey(0)
    k = jax.random.split(key, 8)

    emb_table = jax.random.normal(k[0], (V, E), jnp.float32) * 0.1
    w_ih = jax.random.normal(k[1], (4 * H, E), jnp.float32) * 0.1
    w_hh = jax.random.normal(k[2], (4 * H, H), jnp.float32) * 0.1
    b_ih = jax.random.normal(k[3], (4 * H,), jnp.float32) * 0.1
    b_hh = jax.random.normal(k[4], (4 * H,), jnp.float32) * 0.1
    w_out = jax.random.normal(k[5], (V, H), jnp.float32) * 0.1
    b_out = jax.random.normal(k[6], (V,), jnp.float32) * 0.1
    tokens = jax.random.randint(k[7], (B, T), 0, V, dtype=jnp.int32)

    ref = _reference_forward(tokens, emb_table, w_ih, w_hh, b_ih, b_hh, w_out, b_out)

    # f32 compute path: tight correctness check against the torch-equivalent reference.
    logits_f32 = lstm_lm_forward(tokens, emb_table, w_ih, w_hh, b_ih, b_hh,
                                 w_out, b_out, compute_dtype=jnp.float32)
    logits_f32 = jax.block_until_ready(logits_f32)
    assert logits_f32.shape == (B, T, V), logits_f32.shape
    assert jnp.allclose(logits_f32, ref, rtol=2e-3, atol=2e-3), "f32 mismatch vs reference"

    # bf16 compute path (default): halved weight DMA / 2x MXU throughput on v6e/v7x.
    logits_bf16 = lstm_lm_forward(tokens, emb_table, w_ih, w_hh, b_ih, b_hh,
                                  w_out, b_out, compute_dtype=jnp.bfloat16)
    logits_bf16 = jax.block_until_ready(logits_bf16)
    assert logits_bf16.shape == (B, T, V), logits_bf16.shape
    assert jnp.allclose(logits_bf16, ref, rtol=5e-2, atol=5e-2), "bf16 mismatch vs reference"

    print("KERNEL_OK")
</pallas_src>

<mosaic_0001>
module attributes {stable_mosaic.version = 11 : i64} {
  func.func @_matmul_bias_kernel(%arg0: i32, %arg1: i32, %arg2: i32, %arg3: memref<64x128xf32, #tpu.memory_space<vmem>>, %arg4: memref<128x128xf32, #tpu.memory_space<vmem>>, %arg5: memref<1x128xf32, #tpu.memory_space<vmem>>, %arg6: memref<64x128xf32, #tpu.memory_space<vmem>>, %arg7: memref<64x128xf32, #tpu.memory_space<vmem>>) attributes {dimension_semantics = [#tpu.dimension_semantics<parallel>, #tpu.dimension_semantics<parallel>, #tpu.dimension_semantics<arbitrary>], iteration_bounds = array<i64: 1, 8, 1>, scalar_prefetch = 0 : i64, scratch_operands = 1 : i64, tpu.core_type = #tpu.core_type<tc>, window_params = [{transform_indices = @transform_0, window_bounds = array<i64: 64, 128>}, {transform_indices = @transform_1, window_bounds = array<i64: 128, 128>}, {transform_indices = @transform_2, window_bounds = array<i64: 1, 128>}, {transform_indices = @transform_3, window_bounds = array<i64: 64, 128>}]} {
    %c0_i32 = arith.constant 0 : i32
    %0 = arith.cmpi eq, %arg2, %c0_i32 : i32
    %1 = arith.extui %0 : i1 to i32
    %c0_i32_0 = arith.constant 0 : i32
    %2 = arith.cmpi ne, %1, %c0_i32_0 : i32
    scf.if %2 {
      %cst_10 = arith.constant 0.000000e+00 : f32
      %12 = vector.broadcast %cst_10 : f32 to vector<64x128xf32>
      %c0_11 = arith.constant 0 : index
      %c0_12 = arith.constant 0 : index
      %13 = vector.load %arg7[%c0_11, %c0_12] : memref<64x128xf32, #tpu.memory_space<vmem>>, vector<64x128xf32>
      tpu.vector_store %arg7[%c0_11, %c0_12], %12 {strides = array<i32>} : memref<64x128xf32, #tpu.memory_space<vmem>>, vector<64x128xf32>,
    } else {
    }
    %c0 = arith.constant 0 : index
    %c0_1 = arith.constant 0 : index
    %3 = vector.load %arg7[%c0, %c0_1] : memref<64x128xf32, #tpu.memory_space<vmem>>, vector<64x128xf32>
    %c0_2 = arith.constant 0 : index
    %c0_3 = arith.constant 0 : index
    %4 = vector.load %arg3[%c0_2, %c0_3] : memref<64x128xf32, #tpu.memory_space<vmem>>, vector<64x128xf32>
    %c0_4 = arith.constant 0 : index
    %c0_5 = arith.constant 0 : index
    %5 = vector.load %arg4[%c0_4, %c0_5] : memref<128x128xf32, #tpu.memory_space<vmem>>, vector<128x128xf32>
    %cst = arith.constant dense<0.000000e+00> : vector<64x128xf32>
    %6 = tpu.matmul %4, %5, %cst {dimension_numbers = #tpu.dot_dimension_numbers<[1], [0], [0], [1], [0, 0, 1, 1], [], []>} : vector<64x128xf32>, vector<128x128xf32>, vector<64x128xf32> -> vector<64x128xf32>
    %7 = arith.addf %3, %6 : vector<64x128xf32>
    %c0_6 = arith.constant 0 : index
    %c0_7 = arith.constant 0 : index
    %8 = vector.load %arg7[%c0_6, %c0_7] : memref<64x128xf32, #tpu.memory_space<vmem>>, vector<64x128xf32>
    tpu.vector_store %arg7[%c0_6, %c0_7], %7 {strides = array<i32>} : memref<64x128xf32, #tpu.memory_space<vmem>>, vector<64x128xf32>,
    %c0_i32_8 = arith.constant 0 : i32
    %9 = arith.cmpi eq, %arg2, %c0_i32_8 : i32
    %10 = arith.extui %9 : i1 to i32
    %c0_i32_9 = arith.constant 0 : i32
    %11 = arith.cmpi ne, %10, %c0_i32_9 : i32
    scf.if %11 {
      %c0_10 = arith.constant 0 : index
      %c0_11 = arith.constant 0 : index
      %12 = vector.load %arg7[%c0_10, %c0_11] : memref<64x128xf32, #tpu.memory_space<vmem>>, vector<64x128xf32>
      %c0_12 = arith.constant 0 : index
      %c0_13 = arith.constant 0 : index
      %13 = vector.load %arg5[%c0_12, %c0_13] : memref<1x128xf32, #tpu.memory_space<vmem>>, vector<1x128xf32>
      %14 = vector.broadcast %13 : vector<1x128xf32> to vector<64x128xf32>
      %15 = arith.addf %12, %14 : vector<64x128xf32>
      %c0_14 = arith.constant 0 : index
      %c0_15 = arith.constant 0 : index
      %16 = vector.load %arg6[%c0_14, %c0_15] : memref<64x128xf32, #tpu.memory_space<vmem>>, vector<64x128xf32>
      tpu.vector_store %arg6[%c0_14, %c0_15], %15 {strides = array<i32>} : memref<64x128xf32, #tpu.memory_space<vmem>>, vector<64x128xf32>,
    } else {
    }
    return
  }
  func.func @transform_0(%arg0: i32, %arg1: i32, %arg2: i32) -> (i32, i32) {
    %c0_i32 = arith.constant 0 : i32
    return %arg0, %arg2 : i32, i32
  }
  func.func @transform_1(%arg0: i32, %arg1: i32, %arg2: i32) -> (i32, i32) {
    %c0_i32 = arith.constant 0 : i32
    return %arg2, %arg1 : i32, i32
  }
  func.func @transform_2(%arg0: i32, %arg1: i32, %arg2: i32) -> (i32, i32) {
    %c0_i32 = arith.constant 0 : i32
    %c0_i32_0 = arith.constant 0 : i32
    return %c0_i32, %arg1 : i32, i32
  }
  func.func @transform_3(%arg0: i32, %arg1: i32, %arg2: i32) -> (i32, i32) {
    %c0_i32 = arith.constant 0 : i32
    return %arg0, %arg1 : i32, i32
  }
}

</mosaic_0001>

<llo_original>
// kernel: tpu_custom_call.1
$region0: #{tpu_custom_call.1}
  #allocation0 [shape = 'u32[]', space=smem, size = 0x4, offset = 0x4, fixed_abs, tag = 'smem constant byte address 0x4 - core index']
  #allocation1 [shape = 'u32[144,128]{1,0:T(1,128)}', space=vmem, size = 0x12000, scoped, tag = 'internal scratch']
  #allocation2 [shape = 'f32[64,128]{1,0:T(8,128)}', space=vmem, size = 0x8000, scoped, tag = 'scratch operand']
  %s0 = inlined_call_operand.hbm [shape: f32[64,128], index: 0, kind: input, shape index: {}]
  %s1 = inlined_call_operand.hbm [shape: f32[128,1024], index: 1, kind: input, shape index: {}]
  %s2 = inlined_call_operand.hbm [shape: f32[1,1024], index: 2, kind: input, shape index: {}]
  %s3 = inlined_call_operand.hbm [shape: f32[64,1024], index: 3, kind: output, shape index: {}]
  %s4 = sld [smem:[#allocation0]]
  $region65: #{tpu_custom_call.1} parent=0
    _
  %s6 = ssub.s32 1, %s4
  %s7 = scalar_select 0, %s6, %s4
  $region1: #{tpu_custom_call.1} parent=0
    #allocation3 [shape = 'u8[32768]{0}', space=vmem, size = 0x8000, scoped, tag = 'input window, operand 0, single buffered']
    #allocation4 [shape = 's32[2]{0}', space=sflag, size = 0x8, scoped, tag = 'scoped memory for tpu_custom_call.1']
    #allocation5 [shape = 's32[2]{0}', space=sflag, size = 0x8, scoped, tag = 'scoped memory for tpu_custom_call.1']
    #allocation6 [shape = 'u8[131072]{0}', space=vmem, size = 0x20000, scoped, tag = 'input window, operand 1']
    #allocation7 [shape = 's32[2]{0}', space=sflag, size = 0x8, scoped, tag = 'scoped memory for tpu_custom_call.1']
    #allocation8 [shape = 'u8[1024]{0}', space=vmem, size = 0x400, scoped, tag = 'input window, operand 2']
    #allocation9 [shape = 'u8[65536]{0}', space=vmem, size = 0x10000, scoped, tag = 'output window, operand 0']
    %8 = vsyncpa [#allocation4], 0
    %9 = vsyncpa [#allocation7], 0
    %s10 = scalar_lea.sflag [#allocation7], 1
    %11 = vsyncpa %s10, 0
    %12 = vsyncpa [#allocation5], 0
    %s13 = scalar_lea.sflag [#allocation5], 1
    %14 = vsyncpa %s13, 0
    loop: start=0, step=1, limit=10
    $region2: #{tpu_custom_call.1} parent=1 // loop_pre_header
      _
    $region3: #{tpu_custom_call.1} parent=1 // loop_header
      %s16 = sphi 0, %s20
      %p17 = scmp.ge.s32.totalorder %s16, 10
      %s23 = sphi 0, %s42
      %s24 = sphi 0, %s38
      %s25 = sphi 0, %s34
      %s26 = sphi 0, %s23
      %s27 = sphi 0, %s24
      %s28 = sphi 0, %s25
      %s29 = sphi 0, %s26
      %s30 = sphi 0, %s27
      %s31 = sphi 0, %s28
      %s47 = sphi 0, %s49
      %s50 = sphi 0, %s47
      %s51 = sphi 0, %s50
      %s67 = sphi 0, %s51
      %s75 = sphi 0, %s77
      %s78 = sphi 0, %s75
      %s79 = sphi 0, %s78
      %s95 = sphi 0, %s79
      %s101 = sphi 0, %s103
      %s104 = sphi 0, %s101
      %s105 = sphi 0, %s104
      %s121 = sphi 0, %s105
      %s129 = sphi 0, %s131
      %s132 = sphi 0, %s129
      %s133 = sphi 0, %s132
      %s149 = sphi 0, %s133
    $region4: #{tpu_custom_call.1} parent=1 // loop_header_branch
      %19 = sbr.rel (%p17) target = $region8
    $region5: #{tpu_custom_call.1} parent=1 // loop_body
      %s21 = ssub.s32 %s16, 1
      %s22 = ssub.s32 %s16, 2
      %s32 = sadd.s32 1, %s25
      %p33 = scmp.ge.s32.totalorder %s32, 1
      %s34 = scalar_select %p33, 0, %s32
      %s35 = sadd.s32 1, %s24
      %s36 = scalar_select %p33, %s35, %s24
      %p37 = scmp.ge.s32.totalorder %s36, 8
      %s38 = scalar_select %p37, 0, %s36
      %s39 = sadd.s32 1, %s23
      %s40 = scalar_select %p37, %s39, %s23
      %p41 = scmp.ge.s32.totalorder %s40, 1
      %s42 = scalar_select %p41, 0, %s40
      %s43 = ssub.s32 %s23, %s42
      %s44 = ssub.s32 %s25, %s34
      %s45 = sor.u32 %s43, %s44
      %p46 = scmp.eq.s32.totalorder %s45, 0
      %s48 = sadd.s32 %s47, 1
      %s49 = scalar_select %p46, %s47, %s48
      %p52 = pneg %p46
      %p53 = scmp.eq.s32.totalorder %s16, 7
      %p54 = por %p52, %p53
      %p55 = scmp.ne.s32.totalorder %s47, %s50
      %p56 = scmp.eq.s32.totalorder %s16, 0
      %p57 = por %p55, %p56
      %p58 = scmp.ne.s32.totalorder %s47, %s50
      %p59 = scmp.eq.s32.totalorder %s21, 7
      %p60 = por %p58, %p59
      %p61 = scmp.ne.s32.totalorder %s50, %s51
      %p62 = scmp.eq.s32.totalorder %s21, 0
      %p63 = por %p61, %p62
      %p64 = scmp.ne.s32.totalorder %s50, %s51
      %p65 = scmp.eq.s32.totalorder %s22, 7
      %p66 = por %p64, %p65
      %p68 = scmp.ne.s32.totalorder %s51, %s67
      %p69 = scmp.eq.s32.totalorder %s22, 0
      %p70 = por %p68, %p69
      %s71 = ssub.s32 %s25, %s34
      %s72 = ssub.s32 %s24, %s38
      %s73 = sor.u32 %s71, %s72
      %p74 = scmp.eq.s32.totalorder %s73, 0
      %s76 = sadd.s32 %s75, 1
      %s77 = scalar_select %p74, %s75, %s76
      %p80 = pneg %p74
      %p81 = scmp.eq.s32.totalorder %s16, 7
      %p82 = por %p80, %p81
      %p83 = scmp.ne.s32.totalorder %s75, %s78
      %p84 = scmp.eq.s32.totalorder %s16, 0
      %p85 = por %p83, %p84
      %p86 = scmp.ne.s32.totalorder %s75, %s78
      %p87 = scmp.eq.s32.totalorder %s21, 7
      %p88 = por %p86, %p87
      %p89 = scmp.ne.s32.totalorder %s78, %s79
      %p90 = scmp.eq.s32.totalorder %s21, 0
      %p91 = por %p89, %p90
      %p92 = scmp.ne.s32.totalorder %s78, %s79
      %p93 = scmp.eq.s32.totalorder %s22, 7
      %p94 = por %p92, %p93
      %p96 = scmp.ne.s32.totalorder %s79, %s95
      %p97 = scmp.eq.s32.totalorder %s22, 0
      %p98 = por %p96, %p97
      %s99 = ssub.s32 %s24, %s38
      %p100 = scmp.eq.s32.totalorder %s99, 0
      %s102 = sadd.s32 %s101, 1
      %s103 = scalar_select %p100, %s101, %s102
      %p106 = pneg %p100
      %p107 = scmp.eq.s32.totalorder %s16, 7
      %p108 = por %p106, %p107
      %p109 = scmp.ne.s32.totalorder %s101, %s104
      %p110 = scmp.eq.s32.totalorder %s16, 0
      %p111 = por %p109, %p110
      %p112 = scmp.ne.s32.totalorder %s101, %s104
      %p113 = scmp.eq.s32.totalorder %s21, 7
      %p114 = por %p112, %p113
      %p115 = scmp.ne.s32.totalorder %s104, %s105
      %p116 = scmp.eq.s32.totalorder %s21, 0
      %p117 = por %p115, %p116
      %p118 = scmp.ne.s32.totalorder %s104, %s105
      %p119 = scmp.eq.s32.totalorder %s22, 7
      %p120 = por %p118, %p119
      %p122 = scmp.ne.s32.totalorder %s105, %s121
      %p123 = scmp.eq.s32.totalorder %s22, 0
      %p124 = por %p122, %p123
      %s125 = ssub.s32 %s23, %s42
      %s126 = ssub.s32 %s24, %s38
      %s127 = sor.u32 %s125, %s126
      %p128 = scmp.eq.s32.totalorder %s127, 0
      %s130 = sadd.s32 %s129, 1
      %s131 = scalar_select %p128, %s129, %s130
      %p134 = pneg %p128
      %p135 = scmp.eq.s32.totalorder %s16, 7
      %p136 = por %p134, %p135
      %p137 = scmp.ne.s32.totalorder %s129, %s132
      %p138 = scmp.eq.s32.totalorder %s16, 0
      %p139 = por %p137, %p138
      %p140 = scmp.ne.s32.totalorder %s129, %s132
      %p141 = scmp.eq.s32.totalorder %s21, 7
      %p142 = por %p140, %p141
      %p143 = scmp.ne.s32.totalorder %s132, %s133
      %p144 = scmp.eq.s32.totalorder %s21, 0
      %p145 = por %p143, %p144
      %p146 = scmp.ne.s32.totalorder %s132, %s133
      %p147 = scmp.eq.s32.totalorder %s22, 7
      %p148 = por %p146, %p147
      %p150 = scmp.ne.s32.totalorder %s133, %s149
      %p151 = scmp.eq.s32.totalorder %s22, 0
      %p152 = por %p150, %p151
      %p153 = scmp.le.s32.totalorder 1, %s16
      %p154 = scmp.lt.s32.totalorder %s16, 9
      %p155 = pnand %p153, %p154
      %p156 = pneg %p155
      // Predicated region
      $region9: #{tpu_custom_call.1} parent=5 // pred_check
        _
      $region10: #{tpu_custom_call.1} parent=5 // pred_check_branch
        %158 = sbr.rel (%p155) target = $region12
      $region11: #{tpu_custom_call.1} parent=5 // pred_region
        %s159 = ssub.s32 %s16, 1
        // Predicated region
        $region13: #{tpu_custom_call.1} parent=11 // pred_check
          %p160 = pneg %p63
        $region14: #{tpu_custom_call.1} parent=11 // pred_check_branch
          %162 = sbr.rel (%p160) target = $region16
        $region15: #{tpu_custom_call.1} parent=11 // pred_region
          %s163 = smul.u32 8, %s26
          %s165 = ssub.s32 1024, 1024
          %166 = vsyncadd [#allocation4], %s165
          %s167 = sadd.s32 %s28, %s163
          %s168 = smul.addr %s167, 128
          %s169 = scalar_lea.hbm %s0, %s168
          %s170 = sshll.u32 [#allocation3], 4
          %s171 = int_to_ptr.vmem [resolvable:$true] %s170
          %176 = dma.hbm_to_vmem [thread:$0]  %s169, 1024, %s171, [#allocation4], 128, 128, 8
        $region16: #{tpu_custom_call.1} parent=11 // pred_fallthru
          _
      $region12: #{tpu_custom_call.1} parent=5 // pred_fallthru
        _
      %p177 = scmp.lt.s32.totalorder %s16, 8
      // Predicated region
      $region17: #{tpu_custom_call.1} parent=5 // pred_check
        %p178 = pneg %p177
      $region18: #{tpu_custom_call.1} parent=5 // pred_check_branch
        %180 = sbr.rel (%p178) target = $region20
      $region19: #{tpu_custom_call.1} parent=5 // pred_region
        // Predicated region
        $region21: #{tpu_custom_call.1} parent=19 // pred_check
          %p181 = pneg %p85
        $region22: #{tpu_custom_call.1} parent=19 // pred_check_branch
          %183 = sbr.rel (%p181) target = $region24
        $region23: #{tpu_custom_call.1} parent=19 // pred_region
          %s184 = sand.u32 %s16, 1
          %s185 = scalar_lea.sflag [#allocation7], %s184
          %s186 = sand.u32 %s75, 1
          %s187 = smul.addr %s186, 128
          %s188 = scalar_lea.vmem [#allocation6], %s187
          %s189 = smul.u32 16, %s25
          %s191 = ssub.s32 2048, 2048
          %192 = vsyncadd %s185, %s191
          %s193 = smul.addr %s189, 8
          %s194 = sadd.s32 %s24, %s193
          %s195 = smul.addr %s194, 128
          %s196 = scalar_lea.hbm %s1, %s195
          %s197 = sshll.u32 %s188, 4
          %s198 = int_to_ptr.vmem [resolvable:$true] %s197
          %203 = dma.hbm_to_vmem [thread:$0]  %s196, 2048, %s198, %s185, 1024, 128, 8
        $region24: #{tpu_custom_call.1} parent=19 // pred_fallthru
          _
        // Predicated region
        $region25: #{tpu_custom_call.1} parent=19 // pred_check
          %p204 = pneg %p111
        $region26: #{tpu_custom_call.1} parent=19 // pred_check_branch
          %206 = sbr.rel (%p204) target = $region28
        $region27: #{tpu_custom_call.1} parent=19 // pred_region
          %s207 = sand.u32 %s16, 1
          %s208 = scalar_lea.sflag [#allocation7], %s207
          %s209 = sand.u32 %s101, 1
          %s210 = scalar_lea.vmem [#allocation8], %s209
          %s212 = ssub.s32 16, 16
          %213 = vsyncadd %s208, %s212
          %s214 = smul.addr %s24, 16
          %s215 = scalar_lea.hbm %s2, %s214
          %s217 = sshll.u32 %s210, 4
          %s218 = int_to_ptr.vmem [resolvable:$true] %s217
          %220 = dma.hbm_to_vmem [thread:$0]  %s215, 16, %s218, %s208
        $region28: #{tpu_custom_call.1} parent=19 // pred_fallthru
          _
      $region20: #{tpu_custom_call.1} parent=5 // pred_fallthru
        _
      %p221 = scmp.le.s32.totalorder 1, %s16
      %p222 = scmp.lt.s32.totalorder %s16, 9
      %p223 = pnand %p221, %p222
      %p224 = pneg %p223
      // Predicated region
      $region29: #{tpu_custom_call.1} parent=5 // pred_check
        _
      $region30: #{tpu_custom_call.1} parent=5 // pred_check_branch
        %226 = sbr.rel (%p223) target = $region32
      $region31: #{tpu_custom_call.1} parent=5 // pred_region
        %s227 = ssub.s32 %s16, 1
        // Predicated region
        $region33: #{tpu_custom_call.1} parent=31 // pred_check
          %p228 = pneg %p63
        $region34: #{tpu_custom_call.1} parent=31 // pred_check_branch
          %230 = sbr.rel (%p228) target = $region36
        $region35: #{tpu_custom_call.1} parent=31 // pred_region
          %231 = dma.done [#allocation4], 1024
        $region36: #{tpu_custom_call.1} parent=31 // pred_fallthru
          _
        %s232 = sand.u32 %s21, 1
        %s233 = scalar_lea.sflag [#allocation7], %s232
        %s234 = sand.u32 %s78, 1
        %s235 = smul.addr %s234, 128
        %s236 = scalar_lea.vmem [#allocation6], %s235
        // Predicated region
        $region37: #{tpu_custom_call.1} parent=31 // pred_check
          %p237 = pneg %p91
        $region38: #{tpu_custom_call.1} parent=31 // pred_check_branch
          %239 = sbr.rel (%p237) target = $region40
        $region39: #{tpu_custom_call.1} parent=31 // pred_region
          %240 = dma.done %s233, 2048
        $region40: #{tpu_custom_call.1} parent=31 // pred_fallthru
          _
        %s241 = sand.u32 %s21, 1
        %s242 = scalar_lea.sflag [#allocation7], %s241
        %s243 = sand.u32 %s104, 1
        %s244 = scalar_lea.vmem [#allocation8], %s243
        // Predicated region
        $region41: #{tpu_custom_call.1} parent=31 // pred_check
          %p245 = pneg %p117
        $region42: #{tpu_custom_call.1} parent=31 // pred_check_branch
          %247 = sbr.rel (%p245) target = $region44
        $region43: #{tpu_custom_call.1} parent=31 // pred_region
          %248 = dma.done %s242, 16
        $region44: #{tpu_custom_call.1} parent=31 // pred_fallthru
          _
        %p249 = pneg %p63
        %p250 = pneg %p60
        %s251 = sand.u32 %s21, 1
        %s252 = scalar_lea.sflag [#allocation7], %s251
        %s253 = sand.u32 %s78, 1
        %s254 = smul.addr %s253, 128
        %s255 = scalar_lea.vmem [#allocation6], %s254
        %p256 = pneg %p91
        %p257 = pneg %p88
        %s258 = sand.u32 %s21, 1
        %s259 = scalar_lea.sflag [#allocation7], %s258
        %s260 = sand.u32 %s104, 1
        %s261 = scalar_lea.vmem [#allocation8], %s260
        %p262 = pneg %p117
        %p263 = pneg %p114
        %p264 = pneg %p145
        %p265 = pneg %p142
        %s266 = sand.u32 %s132, 1
        %s267 = scalar_lea.sflag [#allocation5], %s266
        %s268 = sand.u32 %s132, 1
        %s269 = smul.addr %s268, 64
        %s270 = scalar_lea.vmem [#allocation9], %s269
        %s271 = smul.u32 8, %s26
        %s272 = smul.u32 16, %s28
        %s273 = smul.u32 8, %s26
        %p274 = scmp.eq.s32.totalorder %s28, 0
        // Predicated region
        $region45: #{tpu_custom_call.1} parent=31 // pred_check
          %p275 = pneg %p274
        $region46: #{tpu_custom_call.1} parent=31 // pred_check_branch
          %277 = sbr.rel (%p275) target = $region48
        $region47: #{tpu_custom_call.1} parent=31 // pred_region
          %278 = vst [vmem:[#allocation2] sm:$0xff] 0.0
          %279 = vst [vmem:[#allocation2 + $0x8] sm:$0xff] 0.0
          %280 = vst [vmem:[#allocation2 + $0x10] sm:$0xff] 0.0
          %281 = vst [vmem:[#allocation2 + $0x18] sm:$0xff] 0.0
          %282 = vst [vmem:[#allocation2 + $0x20] sm:$0xff] 0.0
          %283 = vst [vmem:[#allocation2 + $0x28] sm:$0xff] 0.0
          %284 = vst [vmem:[#allocation2 + $0x30] sm:$0xff] 0.0
          %285 = vst [vmem:[#allocation2 + $0x38] sm:$0xff] 0.0
        $region48: #{tpu_custom_call.1} parent=31 // pred_fallthru
          _
        %v286 = vld [vmem:[#allocation2] sm:$0xff]
        %v287 = vld [vmem:[#allocation2 + $0x8] sm:$0xff]
        %v288 = vld [vmem:[#allocation2 + $0x10] sm:$0xff]
        %v289 = vld [vmem:[#allocation2 + $0x18] sm:$0xff]
        %v290 = vld [vmem:[#allocation2 + $0x20] sm:$0xff]
        %v291 = vld [vmem:[#allocation2 + $0x28] sm:$0xff]
        %v292 = vld [vmem:[#allocation2 + $0x30] sm:$0xff]
        %v293 = vld [vmem:[#allocation2 + $0x38] sm:$0xff]
        %v294 = vld [vmem:[#allocation3] sm:$0xff]
        %v295 = vld [vmem:[#allocation3 + $0x8] sm:$0xff]
        %v296 = vld [vmem:[#allocation3 + $0x10] sm:$0xff]
        %v297 = vld [vmem:[#allocation3 + $0x18] sm:$0xff]
        %v298 = vld [vmem:[#allocation3 + $0x20] sm:$0xff]
        %v299 = vld [vmem:[#allocation3 + $0x28] sm:$0xff]
        %v300 = vld [vmem:[#allocation3 + $0x30] sm:$0xff]
        %v301 = vld [vmem:[#allocation3 + $0x38] sm:$0xff]
        %v302 = vld [vmem:[%s236] sm:$0xff]
        %v303 = vld [vmem:[%s236 + $0x8] sm:$0xff]
        %v304 = vld [vmem:[%s236 + $0x10] sm:$0xff]
        %v305 = vld [vmem:[%s236 + $0x18] sm:$0xff]
        %v306 = vld [vmem:[%s236 + $0x20] sm:$0xff]
        %v307 = vld [vmem:[%s236 + $0x28] sm:$0xff]
        %v308 = vld [vmem:[%s236 + $0x30] sm:$0xff]
        %v309 = vld [vmem:[%s236 + $0x38] sm:$0xff]
        %v310 = vld [vmem:[%s236 + $0x40] sm:$0xff]
        %v311 = vld [vmem:[%s236 + $0x48] sm:$0xff]
        %v312 = vld [vmem:[%s236 + $0x50] sm:$0xff]
        %v313 = vld [vmem:[%s236 + $0x58] sm:$0xff]
        %v314 = vld [vmem:[%s236 + $0x60] sm:$0xff]
        %v315 = vld [vmem:[%s236 + $0x68] sm:$0xff]
        %v316 = vld [vmem:[%s236 + $0x70] sm:$0xff]
        %v317 = vld [vmem:[%s236 + $0x78] sm:$0xff]
        %318 = vmatprep.subr.mxu0 0.0
        %319 = vmatpush1.msra.mxu0 %v302
        %320 = vmatprep.subr.mxu0 0.0
        %321 = vmatpush1.msra.mxu0 %v303
        %322 = vmatprep.subr.mxu0 0.0
        %323 = vmatpush1.msra.mxu0 %v304
        %324 = vmatprep.subr.mxu0 0.0
        %325 = vmatpush1.msra.mxu0 %v305
        %326 = vmatprep.subr.mxu0 0.0
        %327 = vmatpush1.msra.mxu0 %v306
        %328 = vmatprep.subr.mxu0 0.0
        %329 = vmatpush1.msra.mxu0 %v307
        %330 = vmatprep.subr.mxu0 0.0
        %331 = vmatpush1.msra.mxu0 %v308
        %332 = vmatprep.subr.mxu0 0.0
        %333 = vmatpush1.msra.mxu0 %v309
        %334 = vmatprep.subr.mxu0 0.0
        %335 = vmatpush1.msra.mxu0 %v310
        %336 = vmatprep.subr.mxu0 0.0
        %337 = vmatpush1.msra.mxu0 %v311
        %338 = vmatprep.subr.mxu0 0.0
        %339 = vmatpush1.msra.mxu0 %v312
        %340 = vmatprep.subr.mxu0 0.0
        %341 = vmatpush1.msra.mxu0 %v313
        %342 = vmatprep.subr.mxu0 0.0
        %343 = vmatpush1.msra.mxu0 %v314
        %344 = vmatprep.subr.mxu0 0.0
        %345 = vmatpush1.msra.mxu0 %v315
        %346 = vmatprep.subr.mxu0 0.0
        %347 = vmatpush1.msra.mxu0 %v316
        %348 = vmatprep.subr.mxu0 0.0
        %349 = vmatpush1.msra.mxu0 %v317
        %350 = vmatprep.subr.mxu0 0.0
        %351 = vmatpush1.msra.mxu0 0.0
        %352 = vmatprep.subr.mxu0 0.0
        %353 = vmatpush1.msra.mxu0 0.0
        %354 = vmatprep.subr.mxu0 0.0
        %355 = vmatpush1.msra.mxu0 0.0
        %356 = vmatprep.subr.mxu0 0.0
        %357 = vmatpush1.msra.mxu0 0.0
        %358 = vmatprep.subr.mxu0 0.0
        %359 = vmatpush1.msra.mxu0 0.0
        %360 = vmatprep.subr.mxu0 0.0
        %361 = vmatpush1.msra.mxu0 0.0
        %362 = vmatprep.subr.mxu0 0.0
        %363 = vmatpush1.msra.mxu0 0.0
        %364 = vmatprep.subr.mxu0 0.0
        %365 = vmatpush1.msra.mxu0 0.0
        %366 = vmatprep.subr.mxu0 0.0
        %367 = vmatpush1.msra.mxu0 0.0
        %368 = vmatprep.subr.mxu0 0.0
        %369 = vmatpush1.msra.mxu0 0.0
        %370 = vmatprep.subr.mxu0 0.0
        %371 = vmatpush1.msra.mxu0 0.0
        %372 = vmatprep.subr.mxu0 0.0
        %373 = vmatpush1.msra.mxu0 0.0
        %374 = vmatprep.subr.mxu0 0.0
        %375 = vmatpush1.msra.mxu0 0.0
        %376 = vmatprep.subr.mxu0 0.0
        %377 = vmatpush1.msra.mxu0 0.0
        %378 = vmatprep.subr.mxu0 0.0
        %379 = vmatpush1.msra.mxu0 0.0
        %380 = vmatprep.subr.mxu0 0.0
        %381 = vmatpush1.msra.mxu0 0.0
        %382 = vmatprep.mubr.f32.mxu0 0.0
        %383 = vmatmul.mubr.f32.gmra.mrb[0].mxu0 %v294
        %v384 = vpop.f32.mrb[0].mxu0
        %v385 = vadd.f32 0.0, %v384
        %v386 = vpop.f32.mrb[0].mxu0
        %387 = vmatprep.mubr.f32.mxu0 0.0
        %388 = vmatmul.mubr.f32.gmra.mrb[0].mxu0 %v295
        %v389 = vpop.f32.mrb[0].mxu0
        %v390 = vadd.f32 0.0, %v389
        %v391 = vpop.f32.mrb[0].mxu0
        %392 = vmatprep.mubr.f32.mxu0 0.0
        %393 = vmatmul.mubr.f32.gmra.mrb[0].mxu0 %v296
        %v394 = vpop.f32.mrb[0].mxu0
        %v395 = vadd.f32 0.0, %v394
        %v396 = vpop.f32.mrb[0].mxu0
        %397 = vmatprep.mubr.f32.mxu0 0.0
        %398 = vmatmul.mubr.f32.gmra.mrb[0].mxu0 %v297
        %v399 = vpop.f32.mrb[0].mxu0
        %v400 = vadd.f32 0.0, %v399
        %v401 = vpop.f32.mrb[0].mxu0
        %402 = vmatprep.mubr.f32.mxu0 0.0
        %403 = vmatmul.mubr.f32.gmra.mrb[0].mxu0 %v298
        %v404 = vpop.f32.mrb[0].mxu0
        %v405 = vadd.f32 0.0, %v404
        %v406 = vpop.f32.mrb[0].mxu0
        %407 = vmatprep.mubr.f32.mxu0 0.0
        %408 = vmatmul.mubr.f32.gmra.mrb[0].mxu0 %v299
        %v409 = vpop.f32.mrb[0].mxu0
        %v410 = vadd.f32 0.0, %v409
        %v411 = vpop.f32.mrb[0].mxu0
        %412 = vmatprep.mubr.f32.mxu0 0.0
        %413 = vmatmul.mubr.f32.gmra.mrb[0].mxu0 %v300
        %v414 = vpop.f32.mrb[0].mxu0
        %v415 = vadd.f32 0.0, %v414
        %v416 = vpop.f32.mrb[0].mxu0
        %417 = vmatprep.mubr.f32.mxu0 0.0
        %418 = vmatmul.mubr.f32.gmra.mrb[0].mxu0 %v301
        %v419 = vpop.f32.mrb[0].mxu0
        %v420 = vadd.f32 0.0, %v419
        %v421 = vpop.f32.mrb[0].mxu0
        %422 = vdwg.mxu0
        %v423 = vadd.f32 %v286, %v385
        %v424 = vadd.f32 %v287, %v390
        %v425 = vadd.f32 %v288, %v395
        %v426 = vadd.f32 %v289, %v400
        %v427 = vadd.f32 %v290, %v405
        %v428 = vadd.f32 %v291, %v410
        %v429 = vadd.f32 %v292, %v415
        %v430 = vadd.f32 %v293, %v420
        %431 = vst [vmem:[#allocation2] sm:$0xff] %v423
        %432 = vst [vmem:[#allocation2 + $0x8] sm:$0xff] %v424
        %433 = vst [vmem:[#allocation2 + $0x10] sm:$0xff] %v425
        %434 = vst [vmem:[#allocation2 + $0x18] sm:$0xff] %v426
        %435 = vst [vmem:[#allocation2 + $0x20] sm:$0xff] %v427
        %436 = vst [vmem:[#allocation2 + $0x28] sm:$0xff] %v428
        %437 = vst [vmem:[#allocation2 + $0x30] sm:$0xff] %v429
        %438 = vst [vmem:[#allocation2 + $0x38] sm:$0xff] %v430
        // Predicated region
        $region49: #{tpu_custom_call.1} parent=31 // pred_check
          %p439 = pneg %p274
        $region50: #{tpu_custom_call.1} parent=31 // pred_check_branch
          %441 = sbr.rel (%p439) target = $region52
        $region51: #{tpu_custom_call.1} parent=31 // pred_region
          %v442 = vld [vmem:[#allocation2] sm:$0xff]
          %v443 = vld [vmem:[#allocation2 + $0x8] sm:$0xff]
          %v444 = vld [vmem:[#allocation2 + $0x10] sm:$0xff]
          %v445 = vld [vmem:[#allocation2 + $0x18] sm:$0xff]
          %v446 = vld [vmem:[#allocation2 + $0x20] sm:$0xff]
          %v447 = vld [vmem:[#allocation2 + $0x28] sm:$0xff]
          %v448 = vld [vmem:[#allocation2 + $0x30] sm:$0xff]
          %v449 = vld [vmem:[#allocation2 + $0x38] sm:$0xff]
          %v450 = vld [vmem:[%s244] sm:$0x1]
          %v452 = vlaneseq
          %v453 = vshrl.u32 %v452, 7
          %v454 = vsub.s32 0, %v453
          %v455 = vrot.slane %v450, %v454
          %v457 = vadd.f32 %v442, %v455
          %v458 = vadd.f32 %v443, %v455
          %v459 = vadd.f32 %v444, %v455
          %v460 = vadd.f32 %v445, %v455
          %v461 = vadd.f32 %v446, %v455
          %v462 = vadd.f32 %v447, %v455
          %v463 = vadd.f32 %v448, %v455
          %v464 = vadd.f32 %v449, %v455
          %465 = vst [vmem:[%s270] sm:$0xff] %v457
          %466 = vst [vmem:[%s270 + $0x8] sm:$0xff] %v458
          %467 = vst [vmem:[%s270 + $0x10] sm:$0xff] %v459
          %468 = vst [vmem:[%s270 + $0x18] sm:$0xff] %v460
          %469 = vst [vmem:[%s270 + $0x20] sm:$0xff] %v461
          %470 = vst [vmem:[%s270 + $0x28] sm:$0xff] %v462
          %471 = vst [vmem:[%s270 + $0x30] sm:$0xff] %v463
          %472 = vst [vmem:[%s270 + $0x38] sm:$0xff] %v464
        $region52: #{tpu_custom_call.1} parent=31 // pred_fallthru
          _
        %s473 = sand.u32 %s132, 1
        %s474 = scalar_lea.sflag [#allocation5], %s473
        %s475 = sand.u32 %s132, 1
        %s476 = smul.addr %s475, 64
        %s477 = scalar_lea.vmem [#allocation9], %s476
        // Predicated region
        $region53: #{tpu_custom_call.1} parent=31 // pred_check
          %p478 = pneg %p142
        $region54: #{tpu_custom_call.1} parent=31 // pred_check_branch
          %480 = sbr.rel (%p478) target = $region56
        $region55: #{tpu_custom_call.1} parent=31 // pred_region
          %s481 = smul.u32 8, %s26
          %s483 = ssub.s32 1024, 1024
          %484 = vsyncadd %s474, %s483
          %s485 = smul.addr %s481, 8
          %s486 = sadd.s32 %s27, %s485
          %s487 = smul.addr %s486, 128
          %s488 = scalar_lea.hbm %s3, %s487
          %s489 = sshll.u32 %s477, 4
          %s490 = int_to_ptr.vmem [resolvable:$true] %s489
          %495 = dma.vmem_to_hbm [thread:$0]  %s490, 1024, %s488, %s474, 128, 1024, 8
        $region56: #{tpu_custom_call.1} parent=31 // pred_fallthru
          _
      $region32: #{tpu_custom_call.1} parent=5 // pred_fallthru
        _
      %p496 = scmp.le.s32.totalorder 2, %s16
      // Predicated region
      $region57: #{tpu_custom_call.1} parent=5 // pred_check
        %p497 = pneg %p496
      $region58: #{tpu_custom_call.1} parent=5 // pred_check_branch
        %499 = sbr.rel (%p497) target = $region60
      $region59: #{tpu_custom_call.1} parent=5 // pred_region
        %s500 = ssub.s32 %s16, 2
        // Predicated region
        $region61: #{tpu_custom_call.1} parent=59 // pred_check
          %p501 = pneg %p148
        $region62: #{tpu_custom_call.1} parent=59 // pred_check_branch
          %503 = sbr.rel (%p501) target = $region64
        $region63: #{tpu_custom_call.1} parent=59 // pred_region
          %s504 = sand.u32 %s133, 1
          %s505 = scalar_lea.sflag [#allocation5], %s504
          %s506 = sand.u32 %s133, 1
          %s507 = smul.addr %s506, 64
          %s508 = scalar_lea.vmem [#allocation9], %s507
          %509 = dma.done %s505, 1024
        $region64: #{tpu_custom_call.1} parent=59 // pred_fallthru
          _
      $region60: #{tpu_custom_call.1} parent=5 // pred_fallthru
        _
    $region6: #{tpu_custom_call.1} parent=1 // loop_footer
      %s20 = sadd.s32 1, %s16
    $region7: #{tpu_custom_call.1} parent=1 // loop_footer_branch
      %15 = sbr.rel target = $region3
    $region8: #{tpu_custom_call.1} parent=1 // loop_exit
      _
    %510 = vsyncpa [#allocation4], 1
    %s511 = scalar_lea.sflag [#allocation4], 1
    %512 = vsyncpa %s511, 1
    %513 = vsyncpa [#allocation7], 1
    %s514 = scalar_lea.sflag [#allocation7], 1
    %515 = vsyncpa %s514, 1
    %516 = vsyncpa [#allocation5], 1
    %s517 = scalar_lea.sflag [#allocation5], 1
    %518 = vsyncpa %s517, 1

</llo_original>
